<compile_context>
chip_gen: v7x
topology: tpu7x:2x2x1
jax: 0.10.0
libtpu: 0.0.40
codegen_flags: <defaults>
</compile_context>

<pallas_src>
import functools

import jax
import jax.numpy as jnp
from jax.experimental import pallas as pl
from jax.experimental.pallas import tpu as pltpu


def _binclf_kernel(x_ref, w1_ref, b1_ref, w2_ref, b2_ref, o_ref, acc_ref):
    k = pl.program_id(1)

    @pl.when(k == 0)
    def _():
        acc_ref[...] = jnp.zeros_like(acc_ref)

    # Partial contraction over this K tile: (tn, tk) x (C_out, tk) -> (tn, C_out).
    acc_ref[...] += jnp.einsum(
        "nk,ck->nc", x_ref[...], w1_ref[...],
        preferred_element_type=jnp.float32)

    @pl.when(k == pl.num_programs(1) - 1)
    def _():
        # conv bias + ReLU, then the tiny fc as a VPU broadcast-FMA + lane reduce
        # (C_out is far below 128, so the MXU would be >95% padding here).
        h = jnp.maximum(acc_ref[...] + b1_ref[...], 0.0)           # (tn, C_out)
        y = jnp.sum(h * w2_ref[...], axis=1, keepdims=True)        # (tn, 1)
        o_ref[...] = (y + b2_ref[...]).astype(o_ref.dtype)


def _pick_tk(K, target):
    """Largest multiple of 128 <= target that divides K (K = 1024*nf -> always hits).
    Falls back to a one-time tail pad only if K is not a multiple of 128."""
    cap = (min(target, K) // 128) * 128
    for tk in range(cap, 0, -128):
        if K % tk == 0:
            return tk, K
    tk = max(cap, 128)
    Kp = ((K + tk - 1) // tk) * tk
    return tk, Kp


@functools.partial(jax.jit, static_argnames=("tn", "tk"))
def bin_clf(features, conv_w, conv_b, fc_w, fc_b, *, tn=256, tk=2048):
    """features: (N, 16*nf, 8, 8); conv_w: (nf, 16*nf, 8, 8); conv_b: (nf,);
    fc_w: (1, nf); fc_b: (1,).  Returns (N, 1) logits (same as BinClf.forward)."""
    N, C_in, H, W = features.shape
    C_out = conv_w.shape[0]
    # The module's fc(in_features=nf) only works when the conv output is 1x1.
    assert (H, W) == (8, 8), "BinClf expects 8x8 feature maps"
    assert conv_w.shape[1:] == (C_in, 8, 8)

    K = C_in * H * W
    x2d = features.reshape(N, K)          # row-major (ci, kh, kw) flatten (free)
    w1 = conv_w.reshape(C_out, K)         # matches x2d column order (free)
    b1 = conv_b.reshape(1, C_out)
    w2 = fc_w.reshape(1, C_out)
    b2 = fc_b.reshape(1, 1)

    # --- K (contraction) tiling: lane dim, multiple of 128 dividing K (no pad). ---
    tk_eff, Kp = _pick_tk(K, tk)
    if Kp != K:   # unreachable for valid BinClf shapes; kept as a safety net
        x2d = jnp.pad(x2d, ((0, 0), (0, Kp - K)))
        w1 = jnp.pad(w1, ((0, 0), (0, Kp - K)))

    # --- N (batch) tiling: sublane dim. No padding copy of X: either one full-dim
    # block (small N) or 8-aligned tiles with a cdiv grid (Pallas drops OOB writes
    # of the tail block; its garbage input rows never reach valid output rows). ---
    if N <= tn:
        tn_eff = N
    else:
        tn_eff = ((tn + 7) // 8) * 8
    grid = (pl.cdiv(N, tn_eff), Kp // tk_eff)

    out = pl.pallas_call(
        _binclf_kernel,
        out_shape=jax.ShapeDtypeStruct((N, 1), features.dtype),
        grid_spec=pltpu.PrefetchScalarGridSpec(
            num_scalar_prefetch=0,
            grid=grid,
            in_specs=[
                pl.BlockSpec((tn_eff, tk_eff), lambda i, k: (i, k)),   # x tile (lane-dense)
                pl.BlockSpec((C_out, tk_eff), lambda i, k: (0, k)),    # conv weight tile
                pl.BlockSpec((1, C_out), lambda i, k: (0, 0)),         # conv bias (resident)
                pl.BlockSpec((1, C_out), lambda i, k: (0, 0)),         # fc weight (resident)
                pl.BlockSpec((1, 1), lambda i, k: (0, 0)),             # fc bias (resident)
            ],
            out_specs=pl.BlockSpec((tn_eff, 1), lambda i, k: (i, 0)),
            scratch_shapes=[pltpu.VMEM((tn_eff, C_out), jnp.float32)],
        ),
        compiler_params=pltpu.CompilerParams(
            dimension_semantics=("parallel", "arbitrary"),
            vmem_limit_bytes=32 * 1024 * 1024,   # fits v5e/v6e/v7x with 2x-buffered tiles
        ),
    )(x2d, w1, b1, w2, b2)

    return out


def bin_clf_ref(features, conv_w, conv_b, fc_w, fc_b):
    """Pure-JAX reference: Conv2d(8x8, VALID) -> ReLU -> flatten -> Linear."""
    conv = jax.lax.conv_general_dilated(
        features, conv_w, window_strides=(1, 1), padding="VALID",
        dimension_numbers=("NCHW", "OIHW", "NCHW"))
    conv = conv + conv_b[None, :, None, None]
    h = jnp.maximum(conv, 0.0).reshape(features.shape[0], -1)
    return h @ fc_w.T + fc_b[None, :]


def _make_params(key, n_filters, N):
    k1, k2, k3, k4, k5 = jax.random.split(key, 5)
    C_in = 16 * n_filters
    features = jax.random.normal(k1, (N, C_in, 8, 8), dtype=jnp.float32)

    fan_conv = C_in * 8 * 8
    bconv = 1.0 / jnp.sqrt(jnp.float32(fan_conv))
    conv_w = jax.random.uniform(k2, (n_filters, C_in, 8, 8), jnp.float32,
                                minval=-bconv, maxval=bconv)
    conv_b = jax.random.uniform(k3, (n_filters,), jnp.float32,
                                minval=-bconv, maxval=bconv)

    bfc = 1.0 / jnp.sqrt(jnp.float32(n_filters))
    fc_w = jax.random.uniform(k4, (1, n_filters), jnp.float32,
                              minval=-bfc, maxval=bfc)
    fc_b = jax.random.uniform(k5, (1,), jnp.float32, minval=-bfc, maxval=bfc)
    return features, conv_w, conv_b, fc_w, fc_b


if __name__ == "__main__":
    key = jax.random.PRNGKey(0)
    ka, kb = jax.random.split(key, 2)

    # Config 1: n_filters=4, batch=2 -> single batch block, 2 K tiles (accumulation).
    args1 = _make_params(ka, n_filters=4, N=2)
    out1 = jax.block_until_ready(bin_clf(*args1))
    ref1 = bin_clf_ref(*args1)
    assert out1.shape == (2, 1), out1.shape
    assert jnp.allclose(out1, ref1, atol=1e-4, rtol=1e-4), \
        float(jnp.max(jnp.abs(out1 - ref1)))

    # Config 2: n_filters=2, batch=16, tn=8 -> multi batch-tile grid, single K tile.
    args2 = _make_params(kb, n_filters=2, N=16)
    out2 = jax.block_until_ready(bin_clf(*args2, tn=8))
    ref2 = bin_clf_ref(*args2)
    assert out2.shape == (16, 1), out2.shape
    assert jnp.allclose(out2, ref2, atol=1e-4, rtol=1e-4), \
        float(jnp.max(jnp.abs(out2 - ref2)))

    print("KERNEL_OK")
</pallas_src>

<mosaic_0001>
module attributes {stable_mosaic.version = 11 : i64} {
  func.func @_binclf_kernel(%arg0: i32, %arg1: i32, %arg2: memref<2x2048xf32, #tpu.memory_space<vmem>>, %arg3: memref<4x2048xf32, #tpu.memory_space<vmem>>, %arg4: memref<1x4xf32, #tpu.memory_space<vmem>>, %arg5: memref<1x4xf32, #tpu.memory_space<vmem>>, %arg6: memref<1x1xf32, #tpu.memory_space<vmem>>, %arg7: memref<2x1xf32, #tpu.memory_space<vmem>>, %arg8: memref<2x4xf32, #tpu.memory_space<vmem>>) attributes {dimension_semantics = [#tpu.dimension_semantics<parallel>, #tpu.dimension_semantics<arbitrary>], iteration_bounds = array<i64: 1, 2>, scalar_prefetch = 0 : i64, scratch_operands = 1 : i64, tpu.core_type = #tpu.core_type<tc>, window_params = [{transform_indices = @transform_0, window_bounds = array<i64: 2, 2048>}, {transform_indices = @transform_1, window_bounds = array<i64: 4, 2048>}, {pipeline_mode = #tpu.pipeline_mode<synchronous>, transform_indices = @transform_2, window_bounds = array<i64: 1, 4>}, {pipeline_mode = #tpu.pipeline_mode<synchronous>, transform_indices = @transform_3, window_bounds = array<i64: 1, 4>}, {pipeline_mode = #tpu.pipeline_mode<synchronous>, transform_indices = @transform_4, window_bounds = array<i64: 1, 1>}, {transform_indices = @transform_5, window_bounds = array<i64: 2, 1>}]} {
    %c0_i32 = arith.constant 0 : i32
    %0 = arith.cmpi eq, %arg1, %c0_i32 : i32
    %1 = arith.extui %0 : i1 to i32
    %c0_i32_0 = arith.constant 0 : i32
    %2 = arith.cmpi ne, %1, %c0_i32_0 : i32
    scf.if %2 {
      %cst_9 = arith.constant 0.000000e+00 : f32
      %12 = vector.broadcast %cst_9 : f32 to vector<2x4xf32>
      %c0_10 = arith.constant 0 : index
      %c0_11 = arith.constant 0 : index
      %13 = vector.load %arg8[%c0_10, %c0_11] : memref<2x4xf32, #tpu.memory_space<vmem>>, vector<2x4xf32>
      tpu.vector_store %arg8[%c0_10, %c0_11], %12 {strides = array<i32>} : memref<2x4xf32, #tpu.memory_space<vmem>>, vector<2x4xf32>,
    } else {
    }
    %c0 = arith.constant 0 : index
    %c0_1 = arith.constant 0 : index
    %3 = vector.load %arg8[%c0, %c0_1] : memref<2x4xf32, #tpu.memory_space<vmem>>, vector<2x4xf32>
    %c0_2 = arith.constant 0 : index
    %c0_3 = arith.constant 0 : index
    %4 = vector.load %arg2[%c0_2, %c0_3] : memref<2x2048xf32, #tpu.memory_space<vmem>>, vector<2x2048xf32>
    %c0_4 = arith.constant 0 : index
    %c0_5 = arith.constant 0 : index
    %5 = vector.load %arg3[%c0_4, %c0_5] : memref<4x2048xf32, #tpu.memory_space<vmem>>, vector<4x2048xf32>
    "tpu.trace_start"() <{level = 10 : i32, message = "nk,ck->nc"}> : () -> ()
    %cst = arith.constant dense<0.000000e+00> : vector<2x4xf32>
    %6 = tpu.matmul %4, %5, %cst {dimension_numbers = #tpu.dot_dimension_numbers<[1], [1], [0], [0], [0, 0, 1, 0], [], []>} : vector<2x2048xf32>, vector<4x2048xf32>, vector<2x4xf32> -> vector<2x4xf32>
    "tpu.trace_stop"() : () -> ()
    %7 = arith.addf %3, %6 : vector<2x4xf32>
    %c0_6 = arith.constant 0 : index
    %c0_7 = arith.constant 0 : index
    %8 = vector.load %arg8[%c0_6, %c0_7] : memref<2x4xf32, #tpu.memory_space<vmem>>, vector<2x4xf32>
    tpu.vector_store %arg8[%c0_6, %c0_7], %7 {strides = array<i32>} : memref<2x4xf32, #tpu.memory_space<vmem>>, vector<2x4xf32>,
    %c1_i32 = arith.constant 1 : i32
    %9 = arith.cmpi eq, %arg1, %c1_i32 : i32
    %10 = arith.extui %9 : i1 to i32
    %c0_i32_8 = arith.constant 0 : i32
    %11 = arith.cmpi ne, %10, %c0_i32_8 : i32
    scf.if %11 {
      %c0_9 = arith.constant 0 : index
      %c0_10 = arith.constant 0 : index
      %12 = vector.load %arg8[%c0_9, %c0_10] : memref<2x4xf32, #tpu.memory_space<vmem>>, vector<2x4xf32>
      %c0_11 = arith.constant 0 : index
      %c0_12 = arith.constant 0 : index
      %13 = vector.load %arg4[%c0_11, %c0_12] : memref<1x4xf32, #tpu.memory_space<vmem>>, vector<1x4xf32>
      %14 = vector.broadcast %13 : vector<1x4xf32> to vector<2x4xf32>
      %15 = arith.addf %12, %14 : vector<2x4xf32>
      %cst_13 = arith.constant 0.000000e+00 : f32
      %16 = vector.broadcast %cst_13 : f32 to vector<2x4xf32>
      %17 = arith.maximumf %15, %16 : vector<2x4xf32>
      %c0_14 = arith.constant 0 : index
      %c0_15 = arith.constant 0 : index
      %18 = vector.load %arg5[%c0_14, %c0_15] : memref<1x4xf32, #tpu.memory_space<vmem>>, vector<1x4xf32>
      %19 = vector.broadcast %18 : vector<1x4xf32> to vector<2x4xf32>
      %20 = arith.mulf %17, %19 : vector<2x4xf32>
      %cst_16 = arith.constant dense<0.000000e+00> : vector<2xf32>
      %21 = vector.multi_reduction <add>, %20, %cst_16 [1] : vector<2x4xf32> to vector<2xf32>
      %22 = vector.shape_cast %21 : vector<2xf32> to vector<2x1xf32>
      %c0_17 = arith.constant 0 : index
      %c0_18 = arith.constant 0 : index
      %23 = vector.load %arg6[%c0_17, %c0_18] : memref<1x1xf32, #tpu.memory_space<vmem>>, vector<1x1xf32>
      %24 = vector.broadcast %23 : vector<1x1xf32> to vector<2x1xf32>
      %25 = arith.addf %22, %24 : vector<2x1xf32>
      %c0_19 = arith.constant 0 : index
      %c0_20 = arith.constant 0 : index
      %26 = vector.load %arg7[%c0_19, %c0_20] : memref<2x1xf32, #tpu.memory_space<vmem>>, vector<2x1xf32>
      tpu.vector_store %arg7[%c0_19, %c0_20], %25 {strides = array<i32>} : memref<2x1xf32, #tpu.memory_space<vmem>>, vector<2x1xf32>,
    } else {
    }
    return
  }
  func.func @transform_0(%arg0: i32, %arg1: i32) -> (i32, i32) {
    %c0_i32 = arith.constant 0 : i32
    return %arg0, %arg1 : i32, i32
  }
  func.func @transform_1(%arg0: i32, %arg1: i32) -> (i32, i32) {
    %c0_i32 = arith.constant 0 : i32
    %c0_i32_0 = arith.constant 0 : i32
    return %c0_i32, %arg1 : i32, i32
  }
  func.func @transform_2(%arg0: i32, %arg1: i32) -> (i32, i32) {
    %c0_i32 = arith.constant 0 : i32
    %c0_i32_0 = arith.constant 0 : i32
    %c0_i32_1 = arith.constant 0 : i32
    return %c0_i32, %c0_i32_0 : i32, i32
  }
  func.func @transform_3(%arg0: i32, %arg1: i32) -> (i32, i32) {
    %c0_i32 = arith.constant 0 : i32
    %c0_i32_0 = arith.constant 0 : i32
    %c0_i32_1 = arith.constant 0 : i32
    return %c0_i32, %c0_i32_0 : i32, i32
  }
  func.func @transform_4(%arg0: i32, %arg1: i32) -> (i32, i32) {
    %c0_i32 = arith.constant 0 : i32
    %c0_i32_0 = arith.constant 0 : i32
    %c0_i32_1 = arith.constant 0 : i32
    return %c0_i32, %c0_i32_0 : i32, i32
  }
  func.func @transform_5(%arg0: i32, %arg1: i32) -> (i32, i32) {
    %c0_i32 = arith.constant 0 : i32
    %c0_i32_0 = arith.constant 0 : i32
    return %arg0, %c0_i32 : i32, i32
  }
}

</mosaic_0001>

<llo_original>
// kernel: bin_clf.1
$region0: #{bin_clf.1}
  #allocation0 [shape = 'u32[]', space=smem, size = 0x4, offset = 0x4, fixed_abs, tag = 'smem constant byte address 0x4 - core index']
  #allocation1 [shape = 'u32[144,128]{1,0:T(1,128)}', space=vmem, size = 0x12000, scoped, tag = 'internal scratch']
  #allocation2 [shape = 'f32[2,4]{1,0:T(2,128)}', space=vmem, size = 0x400, scoped, tag = 'scratch operand']
  #allocation3 [shape = 'f32[1,1]{1,0:T(1,128)S(1)}', space=vmem, size = 0x200, scoped, tag = 'scoped memory for bin_clf.1']
  %s0 = inlined_call_operand.vmem [shape: f32[2,4096], index: 0, kind: input, shape index: {}]
  %s1 = inlined_call_operand.vmem [shape: f32[4,4096], index: 1, kind: input, shape index: {}]
  %s2 = inlined_call_operand.vmem [shape: f32[1,4], index: 2, kind: input, shape index: {}]
  %s3 = inlined_call_operand.vmem [shape: f32[1,4], index: 3, kind: input, shape index: {}]
  %s4 = inlined_call_operand.<no memory space> [shape: f32[1,1], index: 4, kind: input, shape index: {}]
  %s5 = inlined_call_operand.vmem [shape: f32[2,1], index: 5, kind: output, shape index: {}]
  %s6 = sld [smem:[#allocation0]]
  $region61: #{bin_clf.1} parent=0
    _
  %s8 = ssub.s32 1, %s6
  %s9 = scalar_select 0, %s8, %s6
  %v10 = vstv %s4
  %11 = vst [vmem:[#allocation3] sm:$0x1] %v10
  loop: start=0, step=1, limit=4
  $region2: #{bin_clf.1} parent=0 // loop_pre_header
    _
  $region3: #{bin_clf.1} parent=0 // loop_header
    %s13 = sphi 0, %s17
    %p14 = scmp.ge.s32.totalorder %s13, 4
    %s20 = sphi 0, %s32
    %s21 = sphi 0, %s28
    %s22 = sphi 0, %s20
    %s23 = sphi 0, %s21
    %s24 = sphi 0, %s22
    %s25 = sphi 0, %s23
    %s37 = sphi 0, %s39
    %s40 = sphi 0, %s37
    %s41 = sphi 0, %s40
    %s57 = sphi 0, %s41
    %s63 = sphi 0, %s65
    %s66 = sphi 0, %s63
    %s67 = sphi 0, %s66
    %s83 = sphi 0, %s67
    %s87 = sphi 0, %s87
    %s89 = sphi 0, %s87
    %s90 = sphi 0, %s89
    %s104 = sphi 0, %s90
    %s108 = sphi 0, %s108
    %s110 = sphi 0, %s108
    %s111 = sphi 0, %s110
    %s125 = sphi 0, %s111
    %s129 = sphi 0, %s129
    %s131 = sphi 0, %s129
    %s132 = sphi 0, %s131
    %s146 = sphi 0, %s132
    %s152 = sphi 0, %s154
    %s155 = sphi 0, %s152
    %s156 = sphi 0, %s155
    %s172 = sphi 0, %s156
  $region4: #{bin_clf.1} parent=0 // loop_header_branch
    %16 = sbr.rel (%p14) target = $region8
  $region5: #{bin_clf.1} parent=0 // loop_body
    %s18 = ssub.s32 %s13, 1
    %s19 = ssub.s32 %s13, 2
    %s26 = sadd.s32 1, %s21
    %p27 = scmp.ge.s32.totalorder %s26, 2
    %s28 = scalar_select %p27, 0, %s26
    %s29 = sadd.s32 1, %s20
    %s30 = scalar_select %p27, %s29, %s20
    %p31 = scmp.ge.s32.totalorder %s30, 1
    %s32 = scalar_select %p31, 0, %s30
    %s33 = ssub.s32 %s20, %s32
    %s34 = ssub.s32 %s21, %s28
    %s35 = sor.u32 %s33, %s34
    %p36 = scmp.eq.s32.totalorder %s35, 0
    %s38 = sadd.s32 %s37, 1
    %s39 = scalar_select %p36, %s37, %s38
    %p42 = pneg %p36
    %p43 = scmp.eq.s32.totalorder %s13, 1
    %p44 = por %p42, %p43
    %p45 = scmp.ne.s32.totalorder %s37, %s40
    %p46 = scmp.eq.s32.totalorder %s13, 0
    %p47 = por %p45, %p46
    %p48 = scmp.ne.s32.totalorder %s37, %s40
    %p49 = scmp.eq.s32.totalorder %s18, 1
    %p50 = por %p48, %p49
    %p51 = scmp.ne.s32.totalorder %s40, %s41
    %p52 = scmp.eq.s32.totalorder %s18, 0
    %p53 = por %p51, %p52
    %p54 = scmp.ne.s32.totalorder %s40, %s41
    %p55 = scmp.eq.s32.totalorder %s19, 1
    %p56 = por %p54, %p55
    %p58 = scmp.ne.s32.totalorder %s41, %s57
    %p59 = scmp.eq.s32.totalorder %s19, 0
    %p60 = por %p58, %p59
    %s61 = ssub.s32 %s21, %s28
    %p62 = scmp.eq.s32.totalorder %s61, 0
    %s64 = sadd.s32 %s63, 1
    %s65 = scalar_select %p62, %s63, %s64
    %p68 = pneg %p62
    %p69 = scmp.eq.s32.totalorder %s13, 1
    %p70 = por %p68, %p69
    %p71 = scmp.ne.s32.totalorder %s63, %s66
    %p72 = scmp.eq.s32.totalorder %s13, 0
    %p73 = por %p71, %p72
    %p74 = scmp.ne.s32.totalorder %s63, %s66
    %p75 = scmp.eq.s32.totalorder %s18, 1
    %p76 = por %p74, %p75
    %p77 = scmp.ne.s32.totalorder %s66, %s67
    %p78 = scmp.eq.s32.totalorder %s18, 0
    %p79 = por %p77, %p78
    %p80 = scmp.ne.s32.totalorder %s66, %s67
    %p81 = scmp.eq.s32.totalorder %s19, 1
    %p82 = por %p80, %p81
    %p84 = scmp.ne.s32.totalorder %s67, %s83
    %p85 = scmp.eq.s32.totalorder %s19, 0
    %p86 = por %p84, %p85
    %s88 = sadd.s32 %s87, 1
    %p91 = scmp.eq.s32.totalorder %s13, 1
    %p92 = scmp.ne.s32.totalorder %s87, %s89
    %p93 = scmp.eq.s32.totalorder %s13, 0
    %p94 = por %p92, %p93
    %p95 = scmp.ne.s32.totalorder %s87, %s89
    %p96 = scmp.eq.s32.totalorder %s18, 1
    %p97 = por %p95, %p96
    %p98 = scmp.ne.s32.totalorder %s89, %s90
    %p99 = scmp.eq.s32.totalorder %s18, 0
    %p100 = por %p98, %p99
    %p101 = scmp.ne.s32.totalorder %s89, %s90
    %p102 = scmp.eq.s32.totalorder %s19, 1
    %p103 = por %p101, %p102
    %p105 = scmp.ne.s32.totalorder %s90, %s104
    %p106 = scmp.eq.s32.totalorder %s19, 0
    %p107 = por %p105, %p106
    %s109 = sadd.s32 %s108, 1
    %p112 = scmp.eq.s32.totalorder %s13, 1
    %p113 = scmp.ne.s32.totalorder %s108, %s110
    %p114 = scmp.eq.s32.totalorder %s13, 0
    %p115 = por %p113, %p114
    %p116 = scmp.ne.s32.totalorder %s108, %s110
    %p117 = scmp.eq.s32.totalorder %s18, 1
    %p118 = por %p116, %p117
    %p119 = scmp.ne.s32.totalorder %s110, %s111
    %p120 = scmp.eq.s32.totalorder %s18, 0
    %p121 = por %p119, %p120
    %p122 = scmp.ne.s32.totalorder %s110, %s111
    %p123 = scmp.eq.s32.totalorder %s19, 1
    %p124 = por %p122, %p123
    %p126 = scmp.ne.s32.totalorder %s111, %s125
    %p127 = scmp.eq.s32.totalorder %s19, 0
    %p128 = por %p126, %p127
    %s130 = sadd.s32 %s129, 1
    %p133 = scmp.eq.s32.totalorder %s13, 1
    %p134 = scmp.ne.s32.totalorder %s129, %s131
    %p135 = scmp.eq.s32.totalorder %s13, 0
    %p136 = por %p134, %p135
    %p137 = scmp.ne.s32.totalorder %s129, %s131
    %p138 = scmp.eq.s32.totalorder %s18, 1
    %p139 = por %p137, %p138
    %p140 = scmp.ne.s32.totalorder %s131, %s132
    %p141 = scmp.eq.s32.totalorder %s18, 0
    %p142 = por %p140, %p141
    %p143 = scmp.ne.s32.totalorder %s131, %s132
    %p144 = scmp.eq.s32.totalorder %s19, 1
    %p145 = por %p143, %p144
    %p147 = scmp.ne.s32.totalorder %s132, %s146
    %p148 = scmp.eq.s32.totalorder %s19, 0
    %p149 = por %p147, %p148
    %s150 = ssub.s32 %s20, %s32
    %p151 = scmp.eq.s32.totalorder %s150, 0
    %s153 = sadd.s32 %s152, 1
    %s154 = scalar_select %p151, %s152, %s153
    %p157 = pneg %p151
    %p158 = scmp.eq.s32.totalorder %s13, 1
    %p159 = por %p157, %p158
    %p160 = scmp.ne.s32.totalorder %s152, %s155
    %p161 = scmp.eq.s32.totalorder %s13, 0
    %p162 = por %p160, %p161
    %p163 = scmp.ne.s32.totalorder %s152, %s155
    %p164 = scmp.eq.s32.totalorder %s18, 1
    %p165 = por %p163, %p164
    %p166 = scmp.ne.s32.totalorder %s155, %s156
    %p167 = scmp.eq.s32.totalorder %s18, 0
    %p168 = por %p166, %p167
    %p169 = scmp.ne.s32.totalorder %s155, %s156
    %p170 = scmp.eq.s32.totalorder %s19, 1
    %p171 = por %p169, %p170
    %p173 = scmp.ne.s32.totalorder %s156, %s172
    %p174 = scmp.eq.s32.totalorder %s19, 0
    %p175 = por %p173, %p174
    %p176 = scmp.le.s32.totalorder 1, %s13
    %p177 = scmp.lt.s32.totalorder %s13, 3
    %p178 = pnand %p176, %p177
    %p179 = pneg %p178
    // Predicated region
    $region9: #{bin_clf.1} parent=5 // pred_check
      _
    $region10: #{bin_clf.1} parent=5 // pred_check_branch
      %181 = sbr.rel (%p178) target = $region12
    $region11: #{bin_clf.1} parent=5 // pred_region
      %s182 = ssub.s32 %s13, 1
      // Predicated region
      $region13: #{bin_clf.1} parent=11 // pred_check
        %p183 = pneg %p100
      $region14: #{bin_clf.1} parent=11 // pred_check_branch
        %185 = sbr.rel (%p183) target = $region16
      $region15: #{bin_clf.1} parent=11 // pred_region
        _
      $region16: #{bin_clf.1} parent=11 // pred_fallthru
        _
      // Predicated region
      $region17: #{bin_clf.1} parent=11 // pred_check
        %p186 = pneg %p121
      $region18: #{bin_clf.1} parent=11 // pred_check_branch
        %188 = sbr.rel (%p186) target = $region20
      $region19: #{bin_clf.1} parent=11 // pred_region
        _
      $region20: #{bin_clf.1} parent=11 // pred_fallthru
        _
      // Predicated region
      $region21: #{bin_clf.1} parent=11 // pred_check
        %p189 = pneg %p142
      $region22: #{bin_clf.1} parent=11 // pred_check_branch
        %191 = sbr.rel (%p189) target = $region24
      $region23: #{bin_clf.1} parent=11 // pred_region
        _
      $region24: #{bin_clf.1} parent=11 // pred_fallthru
        _
    $region12: #{bin_clf.1} parent=5 // pred_fallthru
      _
    %p192 = scmp.lt.s32.totalorder %s13, 2
    // Predicated region
    $region25: #{bin_clf.1} parent=5 // pred_check
      %p193 = pneg %p192
    $region26: #{bin_clf.1} parent=5 // pred_check_branch
      %195 = sbr.rel (%p193) target = $region28
    $region27: #{bin_clf.1} parent=5 // pred_region
      // Predicated region
      $region29: #{bin_clf.1} parent=27 // pred_check
        %p196 = pneg %p47
      $region30: #{bin_clf.1} parent=27 // pred_check_branch
        %198 = sbr.rel (%p196) target = $region32
      $region31: #{bin_clf.1} parent=27 // pred_region
        %s199 = smul.u32 16, %s21
        %p200 = scmp.lt.s32.totalorder %s20, 0
        %s201 = scalar_select %p200, %s20, 0
        %p202 = scmp.lt.s32.totalorder %s199, 31
        %s203 = scalar_select %p202, %s199, 31
        %s204 = smul.addr %s201, 32
        %s205 = sadd.s32 %s203, %s204
        %s206 = smul.addr %s205, 2
        %s207 = scalar_lea.vmem %s0, %s206
        %s208 = smul.u32 16, %s21
      $region32: #{bin_clf.1} parent=27 // pred_fallthru
        _
      // Predicated region
      $region33: #{bin_clf.1} parent=27 // pred_check
        %p209 = pneg %p73
      $region34: #{bin_clf.1} parent=27 // pred_check_branch
        %211 = sbr.rel (%p209) target = $region36
      $region35: #{bin_clf.1} parent=27 // pred_region
        %s212 = smul.u32 16, %s21
        %p213 = scmp.lt.s32.totalorder %s212, 31
        %s214 = scalar_select %p213, %s212, 31
        %s215 = smul.addr %s214, 4
        %s216 = scalar_lea.vmem %s1, %s215
        %s217 = smul.u32 16, %s21
      $region36: #{bin_clf.1} parent=27 // pred_fallthru
        _
    $region28: #{bin_clf.1} parent=5 // pred_fallthru
      _
    %p218 = scmp.le.s32.totalorder 1, %s13
    %p219 = scmp.lt.s32.totalorder %s13, 3
    %p220 = pnand %p218, %p219
    %p221 = pneg %p220
    // Predicated region
    $region37: #{bin_clf.1} parent=5 // pred_check
      _
    $region38: #{bin_clf.1} parent=5 // pred_check_branch
      %223 = sbr.rel (%p220) target = $region40
    $region39: #{bin_clf.1} parent=5 // pred_region
      %s224 = ssub.s32 %s13, 1
      %s225 = smul.u32 16, %s23
      %p226 = scmp.lt.s32.totalorder %s22, 0
      %s227 = scalar_select %p226, %s22, 0
      %p228 = scmp.lt.s32.totalorder %s225, 31
      %s229 = scalar_select %p228, %s225, 31
      %s230 = smul.addr %s227, 32
      %s231 = sadd.s32 %s229, %s230
      %s232 = smul.addr %s231, 2
      %s233 = scalar_lea.vmem %s0, %s232
      %p234 = pneg %p53
      %p235 = pneg %p50
      %s236 = smul.u32 16, %s23
      %p237 = scmp.lt.s32.totalorder %s236, 31
      %s238 = scalar_select %p237, %s236, 31
      %s239 = smul.addr %s238, 4
      %s240 = scalar_lea.vmem %s1, %s239
      %p241 = pneg %p79
      %p242 = pneg %p76
      %p243 = pneg %p100
      %p244 = pneg %p97
      %p245 = pneg %p121
      %p246 = pneg %p118
      %p247 = pneg %p142
      %p248 = pneg %p139
      %p249 = pneg %p168
      %p250 = pneg %p165
      %p251 = scmp.lt.s32.totalorder %s22, 0
      %s252 = scalar_select %p251, %s22, 0
      %s253 = smul.addr %s252, 2
      %s254 = scalar_lea.vmem %s5, %s253
      %s255 = smul.u32 16, %s23
      %p256 = scmp.lt.s32.totalorder %s22, 0
      %s257 = scalar_select %p256, %s22, 0
      %p258 = scmp.lt.s32.totalorder %s255, 31
      %s259 = scalar_select %p258, %s255, 31
      %s260 = smul.addr %s257, 32
      %s261 = sadd.s32 %s259, %s260
      %s262 = smul.addr %s261, 2
      %s263 = scalar_lea.vmem %s0, %s262
      %s264 = smul.u32 16, %s23
      %s265 = smul.u32 16, %s23
      %p266 = scmp.lt.s32.totalorder %s265, 31
      %s267 = scalar_select %p266, %s265, 31
      %s268 = smul.addr %s267, 4
      %s269 = scalar_lea.vmem %s1, %s268
      %s270 = smul.u32 16, %s23
      %p271 = scmp.lt.s32.totalorder %s22, 0
      %s272 = scalar_select %p271, %s22, 0
      %s273 = smul.addr %s272, 2
      %s274 = scalar_lea.vmem %s5, %s273
      %p275 = scmp.eq.s32.totalorder %s23, 0
      // Predicated region
      $region41: #{bin_clf.1} parent=39 // pred_check
        %p276 = pneg %p275
      $region42: #{bin_clf.1} parent=39 // pred_check_branch
        %278 = sbr.rel (%p276) target = $region44
      $region43: #{bin_clf.1} parent=39 // pred_region
        %vm279 = vcmask 25600
        %280 = vst.msk [vmem:[#allocation2] sm:$0x3] %vm279, 0.0
      $region44: #{bin_clf.1} parent=39 // pred_fallthru
        _
      %v281 = vld [vmem:[#allocation2] sm:$0x3]
      %v282 = vld [vmem:[%s263] sm:$0xff]
      %v283 = vld [vmem:[%s263 + $0x8] sm:$0xff]
      %v284 = vld [vmem:[%s263 + $0x10] sm:$0xff]
      %v285 = vld [vmem:[%s263 + $0x18] sm:$0xff]
      %v286 = vld [vmem:[%s269] sm:$0xff]
      %v287 = vld [vmem:[%s269 + $0x8] sm:$0xff]
      %v288 = vld [vmem:[%s269 + $0x10] sm:$0xff]
      %v289 = vld [vmem:[%s269 + $0x18] sm:$0xff]
      %v290 = vld [vmem:[%s269 + $0x20] sm:$0xff]
      %v291 = vld [vmem:[%s269 + $0x28] sm:$0xff]
      %v292 = vld [vmem:[%s269 + $0x30] sm:$0xff]
      %v293 = vld [vmem:[%s269 + $0x38] sm:$0xff]
      %v298 = vcombine.high %v282, %v282
      %v300 = vunpack.c.l.s4 1983009808
      %v301 = vunpack.c.0.s8 %v300
      %v302 = vlaneseq
      %v303 = vshrl.u32 %v302, 7
      %v304 = vsub.s32 %v301, %v303
      %v305 = vrot.slane %v282, %v304
      %v307 = vunpack.c.l.s4 1983009808
      %v308 = vunpack.c.0.s8 %v307
      %v309 = vlaneseq
      %v310 = vshrl.u32 %v309, 7
      %v311 = vsub.s32 %v308, %v310
      %v312 = vrot.slane %v298, %v311
      %v313 = vcombine.high %v305, %v305
      %v314 = vcombine.high %v312, %v312
      %v315 = vcombine.high %v283, %v283
      %v317 = vunpack.c.l.s4 1983009808
      %v318 = vunpack.c.0.s8 %v317
      %v319 = vlaneseq
      %v320 = vshrl.u32 %v319, 7
      %v321 = vsub.s32 %v318, %v320
      %v322 = vrot.slane %v283, %v321
      %v324 = vunpack.c.l.s4 1983009808
      %v325 = vunpack.c.0.s8 %v324
      %v326 = vlaneseq
      %v327 = vshrl.u32 %v326, 7
      %v328 = vsub.s32 %v325, %v327
      %v329 = vrot.slane %v315, %v328
      %v330 = vcombine.high %v322, %v322
      %v331 = vcombine.high %v329, %v329
      %v332 = vcombine.high %v284, %v284
      %v334 = vunpack.c.l.s4 1983009808
      %v335 = vunpack.c.0.s8 %v334
      %v336 = vlaneseq
      %v337 = vshrl.u32 %v336, 7
      %v338 = vsub.s32 %v335, %v337
      %v339 = vrot.slane %v284, %v338
      %v341 = vunpack.c.l.s4 1983009808
      %v342 = vunpack.c.0.s8 %v341
      %v343 = vlaneseq
      %v344 = vshrl.u32 %v343, 7
      %v345 = vsub.s32 %v342, %v344
      %v346 = vrot.slane %v332, %v345
      %v347 = vcombine.high %v339, %v339
      %v348 = vcombine.high %v346, %v346
      %v349 = vcombine.high %v285, %v285
      %v351 = vunpack.c.l.s4 1983009808
      %v352 = vunpack.c.0.s8 %v351
      %v353 = vlaneseq
      %v354 = vshrl.u32 %v353, 7
      %v355 = vsub.s32 %v352, %v354
      %v356 = vrot.slane %v285, %v355
      %v358 = vunpack.c.l.s4 1983009808
      %v359 = vunpack.c.0.s8 %v358
      %v360 = vlaneseq
      %v361 = vshrl.u32 %v360, 7
      %v362 = vsub.s32 %v359, %v361
      %v363 = vrot.slane %v349, %v362
      %v364 = vcombine.high %v356, %v356
      %v365 = vcombine.high %v363, %v363
      %v390 = vcombine.high %v286, %v286
      %v391 = vcombine.high %v287, %v287
      %v392 = vcombine.high %v288, %v288
      %v393 = vcombine.high %v289, %v289
      %v394 = vcombine.high %v290, %v290
      %v395 = vcombine.high %v291, %v291
      %v396 = vcombine.high %v292, %v292
      %v397 = vcombine.high %v293, %v293
      %406 = vmatprep.subr.mxu0 %v390
      %407 = vmatpush1.xpose.msra.mxu0 %v286
      %408 = vmatprep.subr.mxu0 0.0
      %409 = vmatpush1.xpose.msra.mxu0 0.0
      %410 = vmatprep.subr.mxu0 0.0
      %411 = vmatpush1.xpose.msra.mxu0 0.0
      %412 = vmatprep.subr.mxu0 0.0
      %413 = vmatpush1.xpose.msra.mxu0 0.0
      %414 = vmatprep.subr.mxu0 0.0
      %415 = vmatpush1.xpose.msra.mxu0 0.0
      %416 = vmatprep.subr.mxu0 0.0
      %417 = vmatpush1.xpose.msra.mxu0 0.0
      %418 = vmatprep.subr.mxu0 0.0
      %419 = vmatpush1.xpose.msra.mxu0 0.0
      %420 = vmatprep.subr.mxu0 0.0
      %421 = vmatpush1.xpose.msra.mxu0 0.0
      %422 = vmatprep.subr.mxu0 0.0
      %423 = vmatpush1.xpose.msra.mxu0 0.0
      %424 = vmatprep.subr.mxu0 0.0
      %425 = vmatpush1.xpose.msra.mxu0 0.0
      %426 = vmatprep.subr.mxu0 0.0
      %427 = vmatpush1.xpose.msra.mxu0 0.0
      %428 = vmatprep.subr.mxu0 0.0
      %429 = vmatpush1.xpose.msra.mxu0 0.0
      %430 = vmatprep.subr.mxu0 0.0
      %431 = vmatpush1.xpose.msra.mxu0 0.0
      %432 = vmatprep.subr.mxu0 0.0
      %433 = vmatpush1.xpose.msra.mxu0 0.0
      %434 = vmatprep.subr.mxu0 0.0
      %435 = vmatpush1.xpose.msra.mxu0 0.0
      %436 = vmatprep.subr.mxu0 0.0
      %437 = vmatpush1.xpose.msra.mxu0 0.0
      %438 = vmatprep.subr.mxu0 0.0
      %439 = vmatpush1.xpose.msra.mxu0 0.0
      %440 = vmatprep.subr.mxu0 0.0
      %441 = vmatpush1.xpose.msra.mxu0 0.0
      %442 = vmatprep.subr.mxu0 0.0
      %443 = vmatpush1.xpose.msra.mxu0 0.0
      %444 = vmatprep.subr.mxu0 0.0
      %445 = vmatpush1.xpose.msra.mxu0 0.0
      %446 = vmatprep.subr.mxu0 0.0
      %447 = vmatpush1.xpose.msra.mxu0 0.0
      %448 = vmatprep.subr.mxu0 0.0
      %449 = vmatpush1.xpose.msra.mxu0 0.0
      %450 = vmatprep.subr.mxu0 0.0
      %451 = vmatpush1.xpose.msra.mxu0 0.0
      %452 = vmatprep.subr.mxu0 0.0
      %453 = vmatpush1.xpose.msra.mxu0 0.0
      %454 = vmatprep.subr.mxu0 0.0
      %455 = vmatpush1.xpose.msra.mxu0 0.0
      %456 = vmatprep.subr.mxu0 0.0
      %457 = vmatpush1.xpose.msra.mxu0 0.0
      %458 = vmatprep.subr.mxu0 0.0
      %459 = vmatpush1.xpose.msra.mxu0 0.0
      %460 = vmatprep.subr.mxu0 0.0
      %461 = vmatpush1.xpose.msra.mxu0 0.0
      %462 = vmatprep.subr.mxu0 0.0
      %463 = vmatpush1.xpose.msra.mxu0 0.0
      %464 = vmatprep.subr.mxu0 0.0
      %465 = vmatpush1.xpose.msra.mxu0 0.0
      %466 = vmatprep.subr.mxu0 0.0
      %467 = vmatpush1.xpose.msra.mxu0 0.0
      %468 = vmatprep.subr.mxu0 0.0
      %469 = vmatpush1.xpose.msra.mxu0 0.0
      %470 = vmatprep.mubr.f32.mxu0 %v313
      %471 = vmatmul.mubr.f32.gmra.mrb[0].mxu0 %v305
      %v472 = vpop.f32.mrb[0].mxu0
      %v473 = vadd.f32 0.0, %v472
      %v474 = vpop.f32.mrb[0].mxu0
      %475 = vdwg.mxu0
      %476 = vmatprep.subr.mxu0 %v391
      %477 = vmatpush1.xpose.msra.mxu0 %v287
      %478 = vmatprep.subr.mxu0 0.0
      %479 = vmatpush1.xpose.msra.mxu0 0.0
      %480 = vmatprep.subr.mxu0 0.0
      %481 = vmatpush1.xpose.msra.mxu0 0.0
      %482 = vmatprep.subr.mxu0 0.0
      %483 = vmatpush1.xpose.msra.mxu0 0.0
      %484 = vmatprep.subr.mxu0 0.0
      %485 = vmatpush1.xpose.msra.mxu0 0.0
      %486 = vmatprep.subr.mxu0 0.0
      %487 = vmatpush1.xpose.msra.mxu0 0.0
      %488 = vmatprep.subr.mxu0 0.0
      %489 = vmatpush1.xpose.msra.mxu0 0.0
      %490 = vmatprep.subr.mxu0 0.0
      %491 = vmatpush1.xpose.msra.mxu0 0.0
      %492 = vmatprep.subr.mxu0 0.0
      %493 = vmatpush1.xpose.msra.mxu0 0.0
      %494 = vmatprep.subr.mxu0 0.0
      %495 = vmatpush1.xpose.msra.mxu0 0.0
      %496 = vmatprep.subr.mxu0 0.0
      %497 = vmatpush1.xpose.msra.mxu0 0.0
      %498 = vmatprep.subr.mxu0 0.0
      %499 = vmatpush1.xpose.msra.mxu0 0.0
      %500 = vmatprep.subr.mxu0 0.0
      %501 = vmatpush1.xpose.msra.mxu0 0.0
      %502 = vmatprep.subr.mxu0 0.0
      %503 = vmatpush1.xpose.msra.mxu0 0.0
      %504 = vmatprep.subr.mxu0 0.0
      %505 = vmatpush1.xpose.msra.mxu0 0.0
      %506 = vmatprep.subr.mxu0 0.0
      %507 = vmatpush1.xpose.msra.mxu0 0.0
      %508 = vmatprep.subr.mxu0 0.0
      %509 = vmatpush1.xpose.msra.mxu0 0.0
      %510 = vmatprep.subr.mxu0 0.0
      %511 = vmatpush1.xpose.msra.mxu0 0.0
      %512 = vmatprep.subr.mxu0 0.0
      %513 = vmatpush1.xpose.msra.mxu0 0.0
      %514 = vmatprep.subr.mxu0 0.0
      %515 = vmatpush1.xpose.msra.mxu0 0.0
      %516 = vmatprep.subr.mxu0 0.0
      %517 = vmatpush1.xpose.msra.mxu0 0.0
      %518 = vmatprep.subr.mxu0 0.0
      %519 = vmatpush1.xpose.msra.mxu0 0.0
      %520 = vmatprep.subr.mxu0 0.0
      %521 = vmatpush1.xpose.msra.mxu0 0.0
      %522 = vmatprep.subr.mxu0 0.0
      %523 = vmatpush1.xpose.msra.mxu0 0.0
      %524 = vmatprep.subr.mxu0 0.0
      %525 = vmatpush1.xpose.msra.mxu0 0.0
      %526 = vmatprep.subr.mxu0 0.0
      %527 = vmatpush1.xpose.msra.mxu0 0.0
      %528 = vmatprep.subr.mxu0 0.0
      %529 = vmatpush1.xpose.msra.mxu0 0.0
      %530 = vmatprep.subr.mxu0 0.0
      %531 = vmatpush1.xpose.msra.mxu0 0.0
      %532 = vmatprep.subr.mxu0 0.0
      %533 = vmatpush1.xpose.msra.mxu0 0.0
      %534 = vmatprep.subr.mxu0 0.0
      %535 = vmatpush1.xpose.msra.mxu0 0.0
      %536 = vmatprep.subr.mxu0 0.0
      %537 = vmatpush1.xpose.msra.mxu0 0.0
      %538 = vmatprep.subr.mxu0 0.0
      %539 = vmatpush1.xpose.msra.mxu0 0.0
      %540 = vmatprep.mubr.f32.mxu0 %v314
      %541 = vmatmul.mubr.f32.gmra.mrb[0].mxu0 %v312
      %v542 = vpop.f32.mrb[0].mxu0
      %v543 = vadd.f32 %v473, %v542
      %v544 = vpop.f32.mrb[0].mxu0
      %545 = vdwg.mxu0
      %546 = vmatprep.subr.mxu0 %v392
      %547 = vmatpush1.xpose.msra.mxu0 %v288
      %548 = vmatprep.subr.mxu0 0.0
      %549 = vmatpush1.xpose.msra.mxu0 0.0
      %550 = vmatprep.subr.mxu0 0.0
      %551 = vmatpush1.xpose.msra.mxu0 0.0
      %552 = vmatprep.subr.mxu0 0.0
      %553 = vmatpush1.xpose.msra.mxu0 0.0
      %554 = vmatprep.subr.mxu0 0.0
      %555 = vmatpush1.xpose.msra.mxu0 0.0
      %556 = vmatprep.subr.mxu0 0.0
      %557 = vmatpush1.xpose.msra.mxu0 0.0
      %558 = vmatprep.subr.mxu0 0.0
      %559 = vmatpush1.xpose.msra.mxu0 0.0
      %560 = vmatprep.subr.mxu0 0.0
      %561 = vmatpush1.xpose.msra.mxu0 0.0
      %562 = vmatprep.subr.mxu0 0.0
      %563 = vmatpush1.xpose.msra.mxu0 0.0
      %564 = vmatprep.subr.mxu0 0.0
      %565 = vmatpush1.xpose.msra.mxu0 0.0
      %566 = vmatprep.subr.mxu0 0.0
      %567 = vmatpush1.xpose.msra.mxu0 0.0
      %568 = vmatprep.subr.mxu0 0.0
      %569 = vmatpush1.xpose.msra.mxu0 0.0
      %570 = vmatprep.subr.mxu0 0.0
      %571 = vmatpush1.xpose.msra.mxu0 0.0
      %572 = vmatprep.subr.mxu0 0.0
      %573 = vmatpush1.xpose.msra.mxu0 0.0
      %574 = vmatprep.subr.mxu0 0.0
      %575 = vmatpush1.xpose.msra.mxu0 0.0
      %576 = vmatprep.subr.mxu0 0.0
      %577 = vmatpush1.xpose.msra.mxu0 0.0
      %578 = vmatprep.subr.mxu0 0.0
      %579 = vmatpush1.xpose.msra.mxu0 0.0
      %580 = vmatprep.subr.mxu0 0.0
      %581 = vmatpush1.xpose.msra.mxu0 0.0
      %582 = vmatprep.subr.mxu0 0.0
      %583 = vmatpush1.xpose.msra.mxu0 0.0
      %584 = vmatprep.subr.mxu0 0.0
      %585 = vmatpush1.xpose.msra.mxu0 0.0
      %586 = vmatprep.subr.mxu0 0.0
      %587 = vmatpush1.xpose.msra.mxu0 0.0
      %588 = vmatprep.subr.mxu0 0.0
      %589 = vmatpush1.xpose.msra.mxu0 0.0
      %590 = vmatprep.subr.mxu0 0.0
      %591 = vmatpush1.xpose.msra.mxu0 0.0
      %592 = vmatprep.subr.mxu0 0.0
      %593 = vmatpush1.xpose.msra.mxu0 0.0
      %594 = vmatprep.subr.mxu0 0.0
      %595 = vmatpush1.xpose.msra.mxu0 0.0
      %596 = vmatprep.subr.mxu0 0.0
      %597 = vmatpush1.xpose.msra.mxu0 0.0
      %598 = vmatprep.subr.mxu0 0.0
      %599 = vmatpush1.xpose.msra.mxu0 0.0
      %600 = vmatprep.subr.mxu0 0.0
      %601 = vmatpush1.xpose.msra.mxu0 0.0
      %602 = vmatprep.subr.mxu0 0.0
      %603 = vmatpush1.xpose.msra.mxu0 0.0
      %604 = vmatprep.subr.mxu0 0.0
      %605 = vmatpush1.xpose.msra.mxu0 0.0
      %606 = vmatprep.subr.mxu0 0.0
      %607 = vmatpush1.xpose.msra.mxu0 0.0
      %608 = vmatprep.subr.mxu0 0.0
      %609 = vmatpush1.xpose.msra.mxu0 0.0
      %610 = vmatprep.mubr.f32.mxu0 %v330
      %611 = vmatmul.mubr.f32.gmra.mrb[0].mxu0 %v322
      %v612 = vpop.f32.mrb[0].mxu0
      %v613 = vadd.f32 %v543, %v612
      %v614 = vpop.f32.mrb[0].mxu0
      %615 = vdwg.mxu0
      %616 = vmatprep.subr.mxu0 %v393
      %617 = vmatpush1.xpose.msra.mxu0 %v289
      %618 = vmatprep.subr.mxu0 0.0
      %619 = vmatpush1.xpose.msra.mxu0 0.0
      %620 = vmatprep.subr.mxu0 0.0
      %621 = vmatpush1.xpose.msra.mxu0 0.0
      %622 = vmatprep.subr.mxu0 0.0
      %623 = vmatpush1.xpose.msra.mxu0 0.0
      %624 = vmatprep.subr.mxu0 0.0
      %625 = vmatpush1.xpose.msra.mxu0 0.0
      %626 = vmatprep.subr.mxu0 0.0
      %627 = vmatpush1.xpose.msra.mxu0 0.0
      %628 = vmatprep.subr.mxu0 0.0
      %629 = vmatpush1.xpose.msra.mxu0 0.0
      %630 = vmatprep.subr.mxu0 0.0
      %631 = vmatpush1.xpose.msra.mxu0 0.0
      %632 = vmatprep.subr.mxu0 0.0
      %633 = vmatpush1.xpose.msra.mxu0 0.0
      %634 = vmatprep.subr.mxu0 0.0
      %635 = vmatpush1.xpose.msra.mxu0 0.0
      %636 = vmatprep.subr.mxu0 0.0
      %637 = vmatpush1.xpose.msra.mxu0 0.0
      %638 = vmatprep.subr.mxu0 0.0
      %639 = vmatpush1.xpose.msra.mxu0 0.0
      %640 = vmatprep.subr.mxu0 0.0
      %641 = vmatpush1.xpose.msra.mxu0 0.0
      %642 = vmatprep.subr.mxu0 0.0
      %643 = vmatpush1.xpose.msra.mxu0 0.0
      %644 = vmatprep.subr.mxu0 0.0
      %645 = vmatpush1.xpose.msra.mxu0 0.0
      %646 = vmatprep.subr.mxu0 0.0
      %647 = vmatpush1.xpose.msra.mxu0 0.0
      %648 = vmatprep.subr.mxu0 0.0
      %649 = vmatpush1.xpose.msra.mxu0 0.0
      %650 = vmatprep.subr.mxu0 0.0
      %651 = vmatpush1.xpose.msra.mxu0 0.0
      %652 = vmatprep.subr.mxu0 0.0
      %653 = vmatpush1.xpose.msra.mxu0 0.0
      %654 = vmatprep.subr.mxu0 0.0
      %655 = vmatpush1.xpose.msra.mxu0 0.0
      %656 = vmatprep.subr.mxu0 0.0
      %657 = vmatpush1.xpose.msra.mxu0 0.0
      %658 = vmatprep.subr.mxu0 0.0
      %659 = vmatpush1.xpose.msra.mxu0 0.0
      %660 = vmatprep.subr.mxu0 0.0
      %661 = vmatpush1.xpose.msra.mxu0 0.0
      %662 = vmatprep.subr.mxu0 0.0
      %663 = vmatpush1.xpose.msra.mxu0 0.0
      %664 = vmatprep.subr.mxu0 0.0
      %665 = vmatpush1.xpose.msra.mxu0 0.0
      %666 = vmatprep.subr.mxu0 0.0
      %667 = vmatpush1.xpose.msra.mxu0 0.0
      %668 = vmatprep.subr.mxu0 0.0
      %669 = vmatpush1.xpose.msra.mxu0 0.0
      %670 = vmatprep.subr.mxu0 0.0
      %671 = vmatpush1.xpose.msra.mxu0 0.0
      %672 = vmatprep.subr.mxu0 0.0
      %673 = vmatpush1.xpose.msra.mxu0 0.0
      %674 = vmatprep.subr.mxu0 0.0
      %675 = vmatpush1.xpose.msra.mxu0 0.0
      %676 = vmatprep.subr.mxu0 0.0
      %677 = vmatpush1.xpose.msra.mxu0 0.0
      %678 = vmatprep.subr.mxu0 0.0
      %679 = vmatpush1.xpose.msra.mxu0 0.0
      %680 = vmatprep.mubr.f32.mxu0 %v331
      %681 = vmatmul.mubr.f32.gmra.mrb[0].mxu0 %v329
      %v682 = vpop.f32.mrb[0].mxu0
      %v683 = vadd.f32 %v613, %v682
      %v684 = vpop.f32.mrb[0].mxu0
      %685 = vdwg.mxu0
      %686 = vmatprep.subr.mxu0 %v394
      %687 = vmatpush1.xpose.msra.mxu0 %v290
      %688 = vmatprep.subr.mxu0 0.0
      %689 = vmatpush1.xpose.msra.mxu0 0.0
      %690 = vmatprep.subr.mxu0 0.0
      %691 = vmatpush1.xpose.msra.mxu0 0.0
      %692 = vmatprep.subr.mxu0 0.0
      %693 = vmatpush1.xpose.msra.mxu0 0.0
      %694 = vmatprep.subr.mxu0 0.0
      %695 = vmatpush1.xpose.msra.mxu0 0.0
      %696 = vmatprep.subr.mxu0 0.0
      %697 = vmatpush1.xpose.msra.mxu0 0.0
      %698 = vmatprep.subr.mxu0 0.0
      %699 = vmatpush1.xpose.msra.mxu0 0.0
      %700 = vmatprep.subr.mxu0 0.0
      %701 = vmatpush1.xpose.msra.mxu0 0.0
      %702 = vmatprep.subr.mxu0 0.0
      %703 = vmatpush1.xpose.msra.mxu0 0.0
      %704 = vmatprep.subr.mxu0 0.0
      %705 = vmatpush1.xpose.msra.mxu0 0.0
      %706 = vmatprep.subr.mxu0 0.0
      %707 = vmatpush1.xpose.msra.mxu0 0.0
      %708 = vmatprep.subr.mxu0 0.0
      %709 = vmatpush1.xpose.msra.mxu0 0.0
      %710 = vmatprep.subr.mxu0 0.0
      %711 = vmatpush1.xpose.msra.mxu0 0.0
      %712 = vmatprep.subr.mxu0 0.0
      %713 = vmatpush1.xpose.msra.mxu0 0.0
      %714 = vmatprep.subr.mxu0 0.0
      %715 = vmatpush1.xpose.msra.mxu0 0.0
      %716 = vmatprep.subr.mxu0 0.0
      %717 = vmatpush1.xpose.msra.mxu0 0.0
      %718 = vmatprep.subr.mxu0 0.0
      %719 = vmatpush1.xpose.msra.mxu0 0.0
      %720 = vmatprep.subr.mxu0 0.0
      %721 = vmatpush1.xpose.msra.mxu0 0.0
      %722 = vmatprep.subr.mxu0 0.0
      %723 = vmatpush1.xpose.msra.mxu0 0.0
      %724 = vmatprep.subr.mxu0 0.0
      %725 = vmatpush1.xpose.msra.mxu0 0.0
      %726 = vmatprep.subr.mxu0 0.0
      %727 = vmatpush1.xpose.msra.mxu0 0.0
      %728 = vmatprep.subr.mxu0 0.0
      %729 = vmatpush1.xpose.msra.mxu0 0.0
      %730 = vmatprep.subr.mxu0 0.0
      %731 = vmatpush1.xpose.msra.mxu0 0.0
      %732 = vmatprep.subr.mxu0 0.0
      %733 = vmatpush1.xpose.msra.mxu0 0.0
      %734 = vmatprep.subr.mxu0 0.0
      %735 = vmatpush1.xpose.msra.mxu0 0.0
      %736 = vmatprep.subr.mxu0 0.0
      %737 = vmatpush1.xpose.msra.mxu0 0.0
      %738 = vmatprep.subr.mxu0 0.0
      %739 = vmatpush1.xpose.msra.mxu0 0.0
      %740 = vmatprep.subr.mxu0 0.0
      %741 = vmatpush1.xpose.msra.mxu0 0.0
      %742 = vmatprep.subr.mxu0 0.0
      %743 = vmatpush1.xpose.msra.mxu0 0.0
      %744 = vmatprep.subr.mxu0 0.0
      %745 = vmatpush1.xpose.msra.mxu0 0.0
      %746 = vmatprep.subr.mxu0 0.0
      %747 = vmatpush1.xpose.msra.mxu0 0.0
      %748 = vmatprep.subr.mxu0 0.0
      %749 = vmatpush1.xpose.msra.mxu0 0.0
      %750 = vmatprep.mubr.f32.mxu0 %v347
      %751 = vmatmul.mubr.f32.gmra.mrb[0].mxu0 %v339
      %v752 = vpop.f32.mrb[0].mxu0
      %v753 = vadd.f32 %v683, %v752
      %v754 = vpop.f32.mrb[0].mxu0
      %755 = vdwg.mxu0
      %756 = vmatprep.subr.mxu0 %v395
      %757 = vmatpush1.xpose.msra.mxu0 %v291
      %758 = vmatprep.subr.mxu0 0.0
      %759 = vmatpush1.xpose.msra.mxu0 0.0
      %760 = vmatprep.subr.mxu0 0.0
      %761 = vmatpush1.xpose.msra.mxu0 0.0
      %762 = vmatprep.subr.mxu0 0.0
      %763 = vmatpush1.xpose.msra.mxu0 0.0
      %764 = vmatprep.subr.mxu0 0.0
      %765 = vmatpush1.xpose.msra.mxu0 0.0
      %766 = vmatprep.subr.mxu0 0.0
      %767 = vmatpush1.xpose.msra.mxu0 0.0
      %768 = vmatprep.subr.mxu0 0.0
      %769 = vmatpush1.xpose.msra.mxu0 0.0
      %770 = vmatprep.subr.mxu0 0.0
      %771 = vmatpush1.xpose.msra.mxu0 0.0
      %772 = vmatprep.subr.mxu0 0.0
      %773 = vmatpush1.xpose.msra.mxu0 0.0
      %774 = vmatprep.subr.mxu0 0.0
      %775 = vmatpush1.xpose.msra.mxu0 0.0
      %776 = vmatprep.subr.mxu0 0.0
      %777 = vmatpush1.xpose.msra.mxu0 0.0
      %778 = vmatprep.subr.mxu0 0.0
      %779 = vmatpush1.xpose.msra.mxu0 0.0
      %780 = vmatprep.subr.mxu0 0.0
      %781 = vmatpush1.xpose.msra.mxu0 0.0
      %782 = vmatprep.subr.mxu0 0.0
      %783 = vmatpush1.xpose.msra.mxu0 0.0
      %784 = vmatprep.subr.mxu0 0.0
      %785 = vmatpush1.xpose.msra.mxu0 0.0
      %786 = vmatprep.subr.mxu0 0.0
      %787 = vmatpush1.xpose.msra.mxu0 0.0
      %788 = vmatprep.subr.mxu0 0.0
      %789 = vmatpush1.xpose.msra.mxu0 0.0
      %790 = vmatprep.subr.mxu0 0.0
      %791 = vmatpush1.xpose.msra.mxu0 0.0
      %792 = vmatprep.subr.mxu0 0.0
      %793 = vmatpush1.xpose.msra.mxu0 0.0
      %794 = vmatprep.subr.mxu0 0.0
      %795 = vmatpush1.xpose.msra.mxu0 0.0
      %796 = vmatprep.subr.mxu0 0.0
      %797 = vmatpush1.xpose.msra.mxu0 0.0
      %798 = vmatprep.subr.mxu0 0.0
      %799 = vmatpush1.xpose.msra.mxu0 0.0
      %800 = vmatprep.subr.mxu0 0.0
      %801 = vmatpush1.xpose.msra.mxu0 0.0
      %802 = vmatprep.subr.mxu0 0.0
      %803 = vmatpush1.xpose.msra.mxu0 0.0
      %804 = vmatprep.subr.mxu0 0.0
      %805 = vmatpush1.xpose.msra.mxu0 0.0
      %806 = vmatprep.subr.mxu0 0.0
      %807 = vmatpush1.xpose.msra.mxu0 0.0
      %808 = vmatprep.subr.mxu0 0.0
      %809 = vmatpush1.xpose.msra.mxu0 0.0
      %810 = vmatprep.subr.mxu0 0.0
      %811 = vmatpush1.xpose.msra.mxu0 0.0
      %812 = vmatprep.subr.mxu0 0.0
      %813 = vmatpush1.xpose.msra.mxu0 0.0
      %814 = vmatprep.subr.mxu0 0.0
      %815 = vmatpush1.xpose.msra.mxu0 0.0
      %816 = vmatprep.subr.mxu0 0.0
      %817 = vmatpush1.xpose.msra.mxu0 0.0
      %818 = vmatprep.subr.mxu0 0.0
      %819 = vmatpush1.xpose.msra.mxu0 0.0
      %820 = vmatprep.mubr.f32.mxu0 %v348
      %821 = vmatmul.mubr.f32.gmra.mrb[0].mxu0 %v346
      %v822 = vpop.f32.mrb[0].mxu0
      %v823 = vadd.f32 %v753, %v822
      %v824 = vpop.f32.mrb[0].mxu0
      %825 = vdwg.mxu0
      %826 = vmatprep.subr.mxu0 %v396
      %827 = vmatpush1.xpose.msra.mxu0 %v292
      %828 = vmatprep.subr.mxu0 0.0
      %829 = vmatpush1.xpose.msra.mxu0 0.0
      %830 = vmatprep.subr.mxu0 0.0
      %831 = vmatpush1.xpose.msra.mxu0 0.0
      %832 = vmatprep.subr.mxu0 0.0
      %833 = vmatpush1.xpose.msra.mxu0 0.0
      %834 = vmatprep.subr.mxu0 0.0
      %835 = vmatpush1.xpose.msra.mxu0 0.0
      %836 = vmatprep.subr.mxu0 0.0
      %837 = vmatpush1.xpose.msra.mxu0 0.0
      %838 = vmatprep.subr.mxu0 0.0
      %839 = vmatpush1.xpose.msra.mxu0 0.0
      %840 = vmatprep.subr.mxu0 0.0
      %841 = vmatpush1.xpose.msra.mxu0 0.0
      %842 = vmatprep.subr.mxu0 0.0
      %843 = vmatpush1.xpose.msra.mxu0 0.0
      %844 = vmatprep.subr.mxu0 0.0
      %845 = vmatpush1.xpose.msra.mxu0 0.0
      %846 = vmatprep.subr.mxu0 0.0
      %847 = vmatpush1.xpose.msra.mxu0 0.0
      %848 = vmatprep.subr.mxu0 0.0
      %849 = vmatpush1.xpose.msra.mxu0 0.0
      %850 = vmatprep.subr.mxu0 0.0
      %851 = vmatpush1.xpose.msra.mxu0 0.0
      %852 = vmatprep.subr.mxu0 0.0
      %853 = vmatpush1.xpose.msra.mxu0 0.0
      %854 = vmatprep.subr.mxu0 0.0
      %855 = vmatpush1.xpose.msra.mxu0 0.0
      %856 = vmatprep.subr.mxu0 0.0
      %857 = vmatpush1.xpose.msra.mxu0 0.0
      %858 = vmatprep.subr.mxu0 0.0
      %859 = vmatpush1.xpose.msra.mxu0 0.0
      %860 = vmatprep.subr.mxu0 0.0
      %861 = vmatpush1.xpose.msra.mxu0 0.0
      %862 = vmatprep.subr.mxu0 0.0
      %863 = vmatpush1.xpose.msra.mxu0 0.0
      %864 = vmatprep.subr.mxu0 0.0
      %865 = vmatpush1.xpose.msra.mxu0 0.0
      %866 = vmatprep.subr.mxu0 0.0
      %867 = vmatpush1.xpose.msra.mxu0 0.0
      %868 = vmatprep.subr.mxu0 0.0
      %869 = vmatpush1.xpose.msra.mxu0 0.0
      %870 = vmatprep.subr.mxu0 0.0
      %871 = vmatpush1.xpose.msra.mxu0 0.0
      %872 = vmatprep.subr.mxu0 0.0
      %873 = vmatpush1.xpose.msra.mxu0 0.0
      %874 = vmatprep.subr.mxu0 0.0
      %875 = vmatpush1.xpose.msra.mxu0 0.0
      %876 = vmatprep.subr.mxu0 0.0
      %877 = vmatpush1.xpose.msra.mxu0 0.0
      %878 = vmatprep.subr.mxu0 0.0
      %879 = vmatpush1.xpose.msra.mxu0 0.0
      %880 = vmatprep.subr.mxu0 0.0
      %881 = vmatpush1.xpose.msra.mxu0 0.0
      %882 = vmatprep.subr.mxu0 0.0
      %883 = vmatpush1.xpose.msra.mxu0 0.0
      %884 = vmatprep.subr.mxu0 0.0
      %885 = vmatpush1.xpose.msra.mxu0 0.0
      %886 = vmatprep.subr.mxu0 0.0
      %887 = vmatpush1.xpose.msra.mxu0 0.0
      %888 = vmatprep.subr.mxu0 0.0
      %889 = vmatpush1.xpose.msra.mxu0 0.0
      %890 = vmatprep.mubr.f32.mxu0 %v364
      %891 = vmatmul.mubr.f32.gmra.mrb[0].mxu0 %v356
      %v892 = vpop.f32.mrb[0].mxu0
      %v893 = vadd.f32 %v823, %v892
      %v894 = vpop.f32.mrb[0].mxu0
      %895 = vdwg.mxu0
      %896 = vmatprep.subr.mxu0 %v397
      %897 = vmatpush1.xpose.msra.mxu0 %v293
      %898 = vmatprep.subr.mxu0 0.0
      %899 = vmatpush1.xpose.msra.mxu0 0.0
      %900 = vmatprep.subr.mxu0 0.0
      %901 = vmatpush1.xpose.msra.mxu0 0.0
      %902 = vmatprep.subr.mxu0 0.0
      %903 = vmatpush1.xpose.msra.mxu0 0.0
      %904 = vmatprep.subr.mxu0 0.0
      %905 = vmatpush1.xpose.msra.mxu0 0.0
      %906 = vmatprep.subr.mxu0 0.0
      %907 = vmatpush1.xpose.msra.mxu0 0.0
      %908 = vmatprep.subr.mxu0 0.0
      %909 = vmatpush1.xpose.msra.mxu0 0.0
      %910 = vmatprep.subr.mxu0 0.0
      %911 = vmatpush1.xpose.msra.mxu0 0.0
      %912 = vmatprep.subr.mxu0 0.0
      %913 = vmatpush1.xpose.msra.mxu0 0.0
      %914 = vmatprep.subr.mxu0 0.0
      %915 = vmatpush1.xpose.msra.mxu0 0.0
      %916 = vmatprep.subr.mxu0 0.0
      %917 = vmatpush1.xpose.msra.mxu0 0.0
      %918 = vmatprep.subr.mxu0 0.0
      %919 = vmatpush1.xpose.msra.mxu0 0.0
      %920 = vmatprep.subr.mxu0 0.0
      %921 = vmatpush1.xpose.msra.mxu0 0.0
      %922 = vmatprep.subr.mxu0 0.0
      %923 = vmatpush1.xpose.msra.mxu0 0.0
      %924 = vmatprep.subr.mxu0 0.0
      %925 = vmatpush1.xpose.msra.mxu0 0.0
      %926 = vmatprep.subr.mxu0 0.0
      %927 = vmatpush1.xpose.msra.mxu0 0.0
      %928 = vmatprep.subr.mxu0 0.0
      %929 = vmatpush1.xpose.msra.mxu0 0.0
      %930 = vmatprep.subr.mxu0 0.0
      %931 = vmatpush1.xpose.msra.mxu0 0.0
      %932 = vmatprep.subr.mxu0 0.0
      %933 = vmatpush1.xpose.msra.mxu0 0.0
      %934 = vmatprep.subr.mxu0 0.0
      %935 = vmatpush1.xpose.msra.mxu0 0.0
      %936 = vmatprep.subr.mxu0 0.0
      %937 = vmatpush1.xpose.msra.mxu0 0.0
      %938 = vmatprep.subr.mxu0 0.0
      %939 = vmatpush1.xpose.msra.mxu0 0.0
      %940 = vmatprep.subr.mxu0 0.0
      %941 = vmatpush1.xpose.msra.mxu0 0.0
      %942 = vmatprep.subr.mxu0 0.0
      %943 = vmatpush1.xpose.msra.mxu0 0.0
      %944 = vmatprep.subr.mxu0 0.0
      %945 = vmatpush1.xpose.msra.mxu0 0.0
      %946 = vmatprep.subr.mxu0 0.0
      %947 = vmatpush1.xpose.msra.mxu0 0.0
      %948 = vmatprep.subr.mxu0 0.0
      %949 = vmatpush1.xpose.msra.mxu0 0.0
      %950 = vmatprep.subr.mxu0 0.0
      %951 = vmatpush1.xpose.msra.mxu0 0.0
      %952 = vmatprep.subr.mxu0 0.0
      %953 = vmatpush1.xpose.msra.mxu0 0.0
      %954 = vmatprep.subr.mxu0 0.0
      %955 = vmatpush1.xpose.msra.mxu0 0.0
      %956 = vmatprep.subr.mxu0 0.0
      %957 = vmatpush1.xpose.msra.mxu0 0.0
      %958 = vmatprep.subr.mxu0 0.0
      %959 = vmatpush1.xpose.msra.mxu0 0.0
      %960 = vmatprep.mubr.f32.mxu0 %v365
      %961 = vmatmul.mubr.f32.gmra.mrb[0].mxu0 %v363
      %v962 = vpop.f32.mrb[0].mxu0
      %v963 = vadd.f32 %v893, %v962
      %v964 = vpop.f32.mrb[0].mxu0
      %965 = vdwg.mxu0
      %v966 = vadd.f32 %v281, %v963
      %vm967 = vcmask 25600
      %968 = vst.msk [vmem:[#allocation2] sm:$0x3] %vm967, %v966
      %p969 = scmp.eq.s32.totalorder %s23, 1
      // Predicated region
      $region45: #{bin_clf.1} parent=39 // pred_check
        %p970 = pneg %p969
      $region46: #{bin_clf.1} parent=39 // pred_check_branch
        %972 = sbr.rel (%p970) target = $region48
      $region47: #{bin_clf.1} parent=39 // pred_region
        %v973 = vld [vmem:[#allocation2] sm:$0x3]
        %v974 = vld [vmem:[%s2] sm:$0x1]
        %v976 = vlaneseq
        %v977 = vshrl.u32 %v976, 7
        %v978 = vsub.s32 0, %v977
        %v979 = vrot.slane %v974, %v978
        %v981 = vadd.f32 %v973, %v979
        %v982 = vmax.f32 %v981, 0.0
        %v983 = vld [vmem:[%s3] sm:$0x1]
        %v985 = vlaneseq
        %v986 = vshrl.u32 %v985, 7
        %v987 = vsub.s32 0, %v986
        %v988 = vrot.slane %v983, %v987
        %v990 = vmul.f32 %v982, %v988
        %v991 = vsel %vm967, %v990, 0.0
        %992 = vadd.xlane.f32.xlu0 %v991
        %v993 = vpop.xlane.xlu0 %992
        %v994 = vld [vmem:[#allocation3] sm:$0x1]
        %v996 = vlaneseq
        %v997 = vshrl.u32 %v996, 7
        %v998 = vsub.s32 0, %v997
        %v999 = vrot.slane %v994, %v998
        %v1001 = vadd.f32 %v993, %v999
        %vm1002 = vcmask 1024
        %1003 = vst.msk [vmem:[%s274] sm:$0x3] %vm1002, %v1001
      $region48: #{bin_clf.1} parent=39 // pred_fallthru
        _
      %p1004 = scmp.lt.s32.totalorder %s22, 0
      %s1005 = scalar_select %p1004, %s22, 0
      %s1006 = smul.addr %s1005, 2
      %s1007 = scalar_lea.vmem %s5, %s1006
      // Predicated region
      $region49: #{bin_clf.1} parent=39 // pred_check
        %p1008 = pneg %p165
      $region50: #{bin_clf.1} parent=39 // pred_check_branch
        %1010 = sbr.rel (%p1008) target = $region52
      $region51: #{bin_clf.1} parent=39 // pred_region
        _
      $region52: #{bin_clf.1} parent=39 // pred_fallthru
        _
      // Predicated region
      $region53: #{bin_clf.1} parent=39 // pred_check
        %p1011 = pneg %p165
      $region54: #{bin_clf.1} parent=39 // pred_check_branch
        %1013 = sbr.rel (%p1011) target = $region56
      $region55: #{bin_clf.1} parent=39 // pred_region
        %p1014 = scmp.lt.s32.totalorder %s22, 0
        %s1015 = scalar_select %p1014, %s22, 0
        %s1016 = smul.addr %s1015, 2
        %s1017 = scalar_lea.vmem %s5, %s1016
      $region56: #{bin_clf.1} parent=39 // pred_fallthru
        _
    $region40: #{bin_clf.1} parent=5 // pred_fallthru
      _
    %p1018 = scmp.le.s32.totalorder 2, %s13
    // Predicated region
    $region57: #{bin_clf.1} parent=5 // pred_check
      %p1019 = pneg %p1018
    $region58: #{bin_clf.1} parent=5 // pred_check_branch
      %1021 = sbr.rel (%p1019) target = $region60
    $region59: #{bin_clf.1} parent=5 // pred_region
      %s1022 = ssub.s32 %s13, 2
    $region60: #{bin_clf.1} parent=5 // pred_fallthru
      _
  $region6: #{bin_clf.1} parent=0 // loop_footer
    %s17 = sadd.s32 1, %s13
  $region7: #{bin_clf.1} parent=0 // loop_footer_branch
    %12 = sbr.rel target = $region3
  $region8: #{bin_clf.1} parent=0 // loop_exit
    _

</llo_original>
